<compile_context>
chip_gen: v6e
topology: v6e:2x2x1
jax: 0.10.0
libtpu: 0.0.40
codegen_flags: <defaults>
</compile_context>

<pallas_src>
import jax
import jax.numpy as jnp
from jax import lax
from jax.experimental import pallas as pl
from jax.experimental.pallas import tpu as pltpu


def lstm_classifier_kernel(xext_ref, wrec_ref, wp_ref, out_ref):
    """Whole forward pass (eval mode) in one kernel invocation.

    xext_ref: (T, Bp, K) f32  per-timestep extended MXU LHS rows:
                              lanes [0,H)=0 (h slot), [H,H+F)=x_t,
                              lane H+F = 1.0 (bias lane), rest 0.
    wrec_ref: (K, 2G)   bf16  packed recurrent weight (see wrapper).
    wp_ref:   (K, C)    f32   projection weight, row H = projection bias.
    out_ref:  (Bp, C)   f32   logits (padded batch rows included).
    """
    T, Bp, K = xext_ref.shape
    G = wrec_ref.shape[1] // 2          # = 4*H = 128 lanes of gates
    H = G // 4

    w_rec = wrec_ref[...]               # (K, 2G) bf16, hoisted out of the loop
    lane = lax.broadcasted_iota(jnp.int32, (Bp, G), 1)
    in_h = lane < H                     # lanes that hold the hidden state

    def fused_mm(lhs_f32):
        # One MXU op: [h | x | 1] @ [Whh|Wc ; Wih|0 ; b|bc]
        #   -> columns [0,G)  : next-step gate pre-activations (with biases)
        #      columns [G,2G) : combination-layer pre-activation of h (with bias)
        return jnp.dot(lhs_f32.astype(jnp.bfloat16), w_rec,
                       preferred_element_type=jnp.float32)

    fused = fused_mm(xext_ref[0])       # gates for t=0 (h_{-1} = 0)
    c = jnp.zeros((Bp, G), jnp.float32)
    h_sum = jnp.zeros((Bp, G), jnp.float32)

    for t in range(T):                  # T small & static -> fully unrolled
        gates = fused[:, :G]            # clean vreg-boundary slice
        sig = jax.nn.sigmoid(gates)     # full-vreg EUP ops (no 32-lane slices)
        th = jnp.tanh(gates)
        # PyTorch gate order i,f,g,o sits in lane quarters [0,H),[H,2H),...;
        # align f,g,o onto lanes [0,H) with XLU rolls (i is already there).
        f_al = pltpu.roll(sig, G - H, axis=1)
        g_al = pltpu.roll(th, G - 2 * H, axis=1)
        o_al = pltpu.roll(sig, G - 3 * H, axis=1)
        c = f_al * c + sig * g_al                 # valid in lanes [0,H)
        h_full = o_al * jnp.tanh(c)               # h_t in lanes [0,H)
        # Next MXU LHS: h_t in the first H lanes, x_{t+1} + bias-1 elsewhere.
        # (The last step reuses xext[0]; only its bias lane matters for comb.)
        nxt = t + 1 if t + 1 < T else 0
        combined = jnp.where(in_h, h_full, xext_ref[nxt])
        fused = fused_mm(combined)                # gates_{t+1} AND comb-pre(h_t)
        h_sum = h_sum + jnp.maximum(fused[:, G:], 0.0)   # relu(h_t@Wc + bc)

    h_mean = h_sum * (1.0 / T)                    # lanes >= H are exactly zero
    h_aug = jnp.where(lane == H, 1.0, h_mean)     # constant-1 lane -> + bp
    out_ref[...] = jnp.dot(h_aug.astype(jnp.bfloat16),
                           wp_ref[...].astype(jnp.bfloat16),
                           preferred_element_type=jnp.float32)


def lstm_classifier_forward(x_btf, params):
    """x_btf: (B, T, F) batch-first, like the PyTorch module.  Returns (B, C)."""
    wih, whh, b, wc, bc, wp, bp = params
    B, T, F = x_btf.shape
    H = whh.shape[0]
    C = wp.shape[1]
    G = 4 * H
    K = G                                        # padded contraction dim
    # TODO(synk): kernel is specialized to 4*hidden == 128 lanes (hidden=32),
    # unidirectional, depth=1, aggregation='mean'; other configs need a
    # different lane packing.
    assert G == 128, "kernel specialized to 4*hidden == 128"
    assert H + F + 1 <= K, "hidden + feat + 1 must fit the 128-lane LHS"

    Bp = max(8, ((B + 7) // 8) * 8)              # pad batch to a sublane tile

    # ---- pack weights (cheap; in a real model do this once at init) ----
    w_rec = jnp.zeros((K, 2 * G), jnp.float32)
    w_rec = w_rec.at[:H, :G].set(whh)            # h -> gates
    w_rec = w_rec.at[:H, G:G + H].set(wc)        # h -> combination layer
    w_rec = w_rec.at[H:H + F, :G].set(wih)       # x -> gates
    w_rec = w_rec.at[H + F, :G].set(b[0])        # LSTM bias (via the 1-lane)
    w_rec = w_rec.at[H + F, G:G + H].set(bc[0])  # combination bias
    w_rec = w_rec.astype(jnp.bfloat16)

    wp_aug = jnp.zeros((K, C), jnp.float32)
    wp_aug = wp_aug.at[:H, :].set(wp)
    wp_aug = wp_aug.at[H, :].set(bp[0])          # projection bias (via 1-lane)

    # ---- extended per-timestep input rows: [0_H | x_t | 1 | 0...] ----
    xext = jnp.zeros((T, Bp, K), jnp.float32)
    xext = xext.at[:, :B, H:H + F].set(jnp.transpose(x_btf, (1, 0, 2)))
    xext = xext.at[:, :, H + F].set(1.0)

    full = lambda shape: pl.BlockSpec(shape, lambda: (0,) * len(shape))
    out = pl.pallas_call(
        lstm_classifier_kernel,
        out_shape=jax.ShapeDtypeStruct((Bp, C), jnp.float32),
        grid=(),
        in_specs=[full(xext.shape), full(w_rec.shape), full(wp_aug.shape)],
        out_specs=full((Bp, C)),
        cost_estimate=pl.CostEstimate(
            flops=2 * (T + 1) * Bp * K * 2 * G + 2 * Bp * K * C,
            transcendentals=3 * T * Bp * G,
            bytes_accessed=(xext.size * 4 + w_rec.size * 2
                            + wp_aug.size * 4 + Bp * C * 4)),
        # Working set < 150 KB: default scoped-VMEM limit is plenty.
        # For larger batches, tile Bp over a grid axis with
        # dimension_semantics=("parallel",) to use both v7x TensorCores.
    )(xext, w_rec, wp_aug)
    return out[:B]


def reference_forward(x_btf, params):
    """Pure-JAX f32 reference (mirrors PyTorch eval-mode forward)."""
    wih, whh, b, wc, bc, wp, bp = params
    B, T, F = x_btf.shape
    H = whh.shape[0]

    def cell(carry, x_t):
        h, c = carry
        gates = x_t @ wih + h @ whh + b[0]
        i_g = jax.nn.sigmoid(gates[:, 0 * H:1 * H])
        f_g = jax.nn.sigmoid(gates[:, 1 * H:2 * H])
        g_g = jnp.tanh(gates[:, 2 * H:3 * H])
        o_g = jax.nn.sigmoid(gates[:, 3 * H:4 * H])
        c_new = f_g * c + i_g * g_g
        h_new = o_g * jnp.tanh(c_new)
        return (h_new, c_new), h_new

    x_tbf = jnp.transpose(x_btf, (1, 0, 2))
    (_, _), outs = lax.scan(cell, (jnp.zeros((B, H)), jnp.zeros((B, H))), x_tbf)
    outs = jnp.transpose(outs, (1, 0, 2))            # (B, T, H)
    h = jnp.maximum(outs @ wc + bc[0], 0.0)          # relu(combination_layer)
    h = h.mean(axis=1)                               # mean over time
    return h @ wp + bp[0]                            # projection


def init_params(key, feat_size, hidden_size, tag_size):
    ks = jax.random.split(key, 8)
    s_lstm = 1.0 / jnp.sqrt(hidden_size)
    u = lambda k, shape, s: jax.random.uniform(k, shape, jnp.float32, -s, s)
    wih = u(ks[0], (feat_size, 4 * hidden_size), s_lstm)
    whh = u(ks[1], (hidden_size, 4 * hidden_size), s_lstm)
    b = (u(ks[2], (1, 4 * hidden_size), s_lstm)
         + u(ks[3], (1, 4 * hidden_size), s_lstm))
    s_lin = 1.0 / jnp.sqrt(hidden_size)
    wc = u(ks[4], (hidden_size, hidden_size), s_lin)
    bc = u(ks[5], (1, hidden_size), s_lin)
    wp = u(ks[6], (hidden_size, tag_size), s_lin)
    bp = u(ks[7], (1, tag_size), s_lin)
    return (wih, whh, b, wc, bc, wp, bp)


if __name__ == "__main__":
    # Small shapes consistent with the module: batch=4, seq=8, feat=16,
    # hidden=32, tag_size=8.
    B, T, F, H, C = 4, 8, 16, 32, 8
    key = jax.random.PRNGKey(0)
    k_x, k_p = jax.random.split(key)
    x = jax.random.normal(k_x, (B, T, F), dtype=jnp.float32)
    params = init_params(k_p, F, H, C)

    fwd = jax.jit(lstm_classifier_forward)
    logits = jax.block_until_ready(fwd(x, params))

    ref = reference_forward(x, params)
    assert logits.shape == (B, C)
    err = jnp.max(jnp.abs(logits - ref))
    # bf16 MXU operands (per perf review) need a looser tolerance than the
    # pure-f32 variant (which matched at 1e-4); expected error is ~1e-3.
    assert jnp.allclose(logits, ref, atol=3e-2, rtol=3e-2), (
        f"mismatch: max abs err {err}")

    # TODO(synk): dropout_layer is identity here (eval mode); training-mode
    # stochastic dropout would use pltpu.prng_random_bits if ever needed.
    print("KERNEL_OK")
</pallas_src>

<mosaic_0001>
module attributes {stable_mosaic.version = 11 : i64} {
  func.func @lstm_classifier_kernel(%arg0: memref<8x8x128xf32, #tpu.memory_space<vmem>>, %arg1: memref<128x256xbf16, #tpu.memory_space<vmem>>, %arg2: memref<128x8xf32, #tpu.memory_space<vmem>>, %arg3: memref<8x8xf32, #tpu.memory_space<vmem>>) attributes {dimension_semantics = [], scalar_prefetch = 0 : i64, scratch_operands = 0 : i64, tpu.core_type = #tpu.core_type<tc>} {
    %c0 = arith.constant 0 : index
    %c0_0 = arith.constant 0 : index
    %0 = vector.load %arg1[%c0, %c0_0] : memref<128x256xbf16, #tpu.memory_space<vmem>>, vector<128x256xbf16>
    %1 = tpu.iota {dimensions = array<i32: 1>} : vector<8x128xi32>
    %c32_i32 = arith.constant 32 : i32
    %2 = vector.broadcast %c32_i32 : i32 to vector<8x128xi32>
    %3 = arith.cmpi slt, %1, %2 : vector<8x128xi32>
    %c0_1 = arith.constant 0 : index
    %c0_2 = arith.constant 0 : index
    %c0_3 = arith.constant 0 : index
    %4 = vector.load %arg0[%c0_1, %c0_2, %c0_3] : memref<8x8x128xf32, #tpu.memory_space<vmem>>, vector<1x8x128xf32>
    %5 = vector.shape_cast %4 : vector<1x8x128xf32> to vector<8x128xf32>
    %6 = arith.truncf %5 : vector<8x128xf32> to vector<8x128xbf16>
    %cst = arith.constant dense<0.000000e+00> : vector<8x256xf32>
    %7 = tpu.matmul %6, %0, %cst {dimension_numbers = #tpu.dot_dimension_numbers<[1], [0], [0], [1], [0, 0, 1, 1], [], []>} : vector<8x128xbf16>, vector<128x256xbf16>, vector<8x256xf32> -> vector<8x256xf32>
    %cst_4 = arith.constant 0.000000e+00 : f32
    %8 = vector.broadcast %cst_4 : f32 to vector<8x128xf32>
    %cst_5 = arith.constant 0.000000e+00 : f32
    %9 = vector.broadcast %cst_5 : f32 to vector<8x128xf32>
    %10 = vector.extract_strided_slice %7 {offsets = [0, 0], sizes = [8, 128], strides = [1, 1]} : vector<8x256xf32> to vector<8x128xf32>
    %11 = arith.negf %10 : vector<8x128xf32>
    %12 = math.exp %11 : vector<8x128xf32>
    %cst_6 = arith.constant 1.000000e+00 : f32
    %13 = vector.broadcast %cst_6 : f32 to vector<8x128xf32>
    %14 = arith.addf %13, %12 : vector<8x128xf32>
    %15 = arith.divf %13, %14 : vector<8x128xf32>
    %16 = math.tanh %10 : vector<8x128xf32>
    %c96_i32 = arith.constant 96 : i32
    %17 = tpu.dynamic_rotate %15 by %c96_i32 dim 1 : vector<8x128xf32>, i32 -> vector<8x128xf32>
    %c64_i32 = arith.constant 64 : i32
    %18 = tpu.dynamic_rotate %16 by %c64_i32 dim 1 : vector<8x128xf32>, i32 -> vector<8x128xf32>
    %c32_i32_7 = arith.constant 32 : i32
    %19 = tpu.dynamic_rotate %15 by %c32_i32_7 dim 1 : vector<8x128xf32>, i32 -> vector<8x128xf32>
    %20 = arith.mulf %17, %8 : vector<8x128xf32>
    %21 = arith.mulf %15, %18 : vector<8x128xf32>
    %22 = arith.addf %20, %21 : vector<8x128xf32>
    %23 = math.tanh %22 : vector<8x128xf32>
    %24 = arith.mulf %19, %23 : vector<8x128xf32>
    %c1 = arith.constant 1 : index
    %c0_8 = arith.constant 0 : index
    %c0_9 = arith.constant 0 : index
    %25 = vector.load %arg0[%c1, %c0_8, %c0_9] : memref<8x8x128xf32, #tpu.memory_space<vmem>>, vector<1x8x128xf32>
    %26 = vector.shape_cast %25 : vector<1x8x128xf32> to vector<8x128xf32>
    %27 = arith.select %3, %24, %26 : vector<8x128xi1>, vector<8x128xf32>
    %28 = arith.truncf %27 : vector<8x128xf32> to vector<8x128xbf16>
    %cst_10 = arith.constant dense<0.000000e+00> : vector<8x256xf32>
    %29 = tpu.matmul %28, %0, %cst_10 {dimension_numbers = #tpu.dot_dimension_numbers<[1], [0], [0], [1], [0, 0, 1, 1], [], []>} : vector<8x128xbf16>, vector<128x256xbf16>, vector<8x256xf32> -> vector<8x256xf32>
    %30 = vector.extract_strided_slice %29 {offsets = [0, 128], sizes = [8, 128], strides = [1, 1]} : vector<8x256xf32> to vector<8x128xf32>
    %cst_11 = arith.constant 0.000000e+00 : f32
    %31 = vector.broadcast %cst_11 : f32 to vector<8x128xf32>
    %32 = arith.maximumf %30, %31 : vector<8x128xf32>
    %33 = arith.addf %9, %32 : vector<8x128xf32>
    %34 = vector.extract_strided_slice %29 {offsets = [0, 0], sizes = [8, 128], strides = [1, 1]} : vector<8x256xf32> to vector<8x128xf32>
    %35 = arith.negf %34 : vector<8x128xf32>
    %36 = math.exp %35 : vector<8x128xf32>
    %cst_12 = arith.constant 1.000000e+00 : f32
    %37 = vector.broadcast %cst_12 : f32 to vector<8x128xf32>
    %38 = arith.addf %37, %36 : vector<8x128xf32>
    %39 = arith.divf %37, %38 : vector<8x128xf32>
    %40 = math.tanh %34 : vector<8x128xf32>
    %c96_i32_13 = arith.constant 96 : i32
    %41 = tpu.dynamic_rotate %39 by %c96_i32_13 dim 1 : vector<8x128xf32>, i32 -> vector<8x128xf32>
    %c64_i32_14 = arith.constant 64 : i32
    %42 = tpu.dynamic_rotate %40 by %c64_i32_14 dim 1 : vector<8x128xf32>, i32 -> vector<8x128xf32>
    %c32_i32_15 = arith.constant 32 : i32
    %43 = tpu.dynamic_rotate %39 by %c32_i32_15 dim 1 : vector<8x128xf32>, i32 -> vector<8x128xf32>
    %44 = arith.mulf %41, %22 : vector<8x128xf32>
    %45 = arith.mulf %39, %42 : vector<8x128xf32>
    %46 = arith.addf %44, %45 : vector<8x128xf32>
    %47 = math.tanh %46 : vector<8x128xf32>
    %48 = arith.mulf %43, %47 : vector<8x128xf32>
    %c2 = arith.constant 2 : index
    %c0_16 = arith.constant 0 : index
    %c0_17 = arith.constant 0 : index
    %49 = vector.load %arg0[%c2, %c0_16, %c0_17] : memref<8x8x128xf32, #tpu.memory_space<vmem>>, vector<1x8x128xf32>
    %50 = vector.shape_cast %49 : vector<1x8x128xf32> to vector<8x128xf32>
    %51 = arith.select %3, %48, %50 : vector<8x128xi1>, vector<8x128xf32>
    %52 = arith.truncf %51 : vector<8x128xf32> to vector<8x128xbf16>
    %cst_18 = arith.constant dense<0.000000e+00> : vector<8x256xf32>
    %53 = tpu.matmul %52, %0, %cst_18 {dimension_numbers = #tpu.dot_dimension_numbers<[1], [0], [0], [1], [0, 0, 1, 1], [], []>} : vector<8x128xbf16>, vector<128x256xbf16>, vector<8x256xf32> -> vector<8x256xf32>
    %54 = vector.extract_strided_slice %53 {offsets = [0, 128], sizes = [8, 128], strides = [1, 1]} : vector<8x256xf32> to vector<8x128xf32>
    %cst_19 = arith.constant 0.000000e+00 : f32
    %55 = vector.broadcast %cst_19 : f32 to vector<8x128xf32>
    %56 = arith.maximumf %54, %55 : vector<8x128xf32>
    %57 = arith.addf %33, %56 : vector<8x128xf32>
    %58 = vector.extract_strided_slice %53 {offsets = [0, 0], sizes = [8, 128], strides = [1, 1]} : vector<8x256xf32> to vector<8x128xf32>
    %59 = arith.negf %58 : vector<8x128xf32>
    %60 = math.exp %59 : vector<8x128xf32>
    %cst_20 = arith.constant 1.000000e+00 : f32
    %61 = vector.broadcast %cst_20 : f32 to vector<8x128xf32>
    %62 = arith.addf %61, %60 : vector<8x128xf32>
    %63 = arith.divf %61, %62 : vector<8x128xf32>
    %64 = math.tanh %58 : vector<8x128xf32>
    %c96_i32_21 = arith.constant 96 : i32
    %65 = tpu.dynamic_rotate %63 by %c96_i32_21 dim 1 : vector<8x128xf32>, i32 -> vector<8x128xf32>
    %c64_i32_22 = arith.constant 64 : i32
    %66 = tpu.dynamic_rotate %64 by %c64_i32_22 dim 1 : vector<8x128xf32>, i32 -> vector<8x128xf32>
    %c32_i32_23 = arith.constant 32 : i32
    %67 = tpu.dynamic_rotate %63 by %c32_i32_23 dim 1 : vector<8x128xf32>, i32 -> vector<8x128xf32>
    %68 = arith.mulf %65, %46 : vector<8x128xf32>
    %69 = arith.mulf %63, %66 : vector<8x128xf32>
    %70 = arith.addf %68, %69 : vector<8x128xf32>
    %71 = math.tanh %70 : vector<8x128xf32>
    %72 = arith.mulf %67, %71 : vector<8x128xf32>
    %c3 = arith.constant 3 : index
    %c0_24 = arith.constant 0 : index
    %c0_25 = arith.constant 0 : index
    %73 = vector.load %arg0[%c3, %c0_24, %c0_25] : memref<8x8x128xf32, #tpu.memory_space<vmem>>, vector<1x8x128xf32>
    %74 = vector.shape_cast %73 : vector<1x8x128xf32> to vector<8x128xf32>
    %75 = arith.select %3, %72, %74 : vector<8x128xi1>, vector<8x128xf32>
    %76 = arith.truncf %75 : vector<8x128xf32> to vector<8x128xbf16>
    %cst_26 = arith.constant dense<0.000000e+00> : vector<8x256xf32>
    %77 = tpu.matmul %76, %0, %cst_26 {dimension_numbers = #tpu.dot_dimension_numbers<[1], [0], [0], [1], [0, 0, 1, 1], [], []>} : vector<8x128xbf16>, vector<128x256xbf16>, vector<8x256xf32> -> vector<8x256xf32>
    %78 = vector.extract_strided_slice %77 {offsets = [0, 128], sizes = [8, 128], strides = [1, 1]} : vector<8x256xf32> to vector<8x128xf32>
    %cst_27 = arith.constant 0.000000e+00 : f32
    %79 = vector.broadcast %cst_27 : f32 to vector<8x128xf32>
    %80 = arith.maximumf %78, %79 : vector<8x128xf32>
    %81 = arith.addf %57, %80 : vector<8x128xf32>
    %82 = vector.extract_strided_slice %77 {offsets = [0, 0], sizes = [8, 128], strides = [1, 1]} : vector<8x256xf32> to vector<8x128xf32>
    %83 = arith.negf %82 : vector<8x128xf32>
    %84 = math.exp %83 : vector<8x128xf32>
    %cst_28 = arith.constant 1.000000e+00 : f32
    %85 = vector.broadcast %cst_28 : f32 to vector<8x128xf32>
    %86 = arith.addf %85, %84 : vector<8x128xf32>
    %87 = arith.divf %85, %86 : vector<8x128xf32>
    %88 = math.tanh %82 : vector<8x128xf32>
    %c96_i32_29 = arith.constant 96 : i32
    %89 = tpu.dynamic_rotate %87 by %c96_i32_29 dim 1 : vector<8x128xf32>, i32 -> vector<8x128xf32>
    %c64_i32_30 = arith.constant 64 : i32
    %90 = tpu.dynamic_rotate %88 by %c64_i32_30 dim 1 : vector<8x128xf32>, i32 -> vector<8x128xf32>
    %c32_i32_31 = arith.constant 32 : i32
    %91 = tpu.dynamic_rotate %87 by %c32_i32_31 dim 1 : vector<8x128xf32>, i32 -> vector<8x128xf32>
    %92 = arith.mulf %89, %70 : vector<8x128xf32>
    %93 = arith.mulf %87, %90 : vector<8x128xf32>
    %94 = arith.addf %92, %93 : vector<8x128xf32>
    %95 = math.tanh %94 : vector<8x128xf32>
    %96 = arith.mulf %91, %95 : vector<8x128xf32>
    %c4 = arith.constant 4 : index
    %c0_32 = arith.constant 0 : index
    %c0_33 = arith.constant 0 : index
    %97 = vector.load %arg0[%c4, %c0_32, %c0_33] : memref<8x8x128xf32, #tpu.memory_space<vmem>>, vector<1x8x128xf32>
    %98 = vector.shape_cast %97 : vector<1x8x128xf32> to vector<8x128xf32>
    %99 = arith.select %3, %96, %98 : vector<8x128xi1>, vector<8x128xf32>
    %100 = arith.truncf %99 : vector<8x128xf32> to vector<8x128xbf16>
    %cst_34 = arith.constant dense<0.000000e+00> : vector<8x256xf32>
    %101 = tpu.matmul %100, %0, %cst_34 {dimension_numbers = #tpu.dot_dimension_numbers<[1], [0], [0], [1], [0, 0, 1, 1], [], []>} : vector<8x128xbf16>, vector<128x256xbf16>, vector<8x256xf32> -> vector<8x256xf32>
    %102 = vector.extract_strided_slice %101 {offsets = [0, 128], sizes = [8, 128], strides = [1, 1]} : vector<8x256xf32> to vector<8x128xf32>
    %cst_35 = arith.constant 0.000000e+00 : f32
    %103 = vector.broadcast %cst_35 : f32 to vector<8x128xf32>
    %104 = arith.maximumf %102, %103 : vector<8x128xf32>
    %105 = arith.addf %81, %104 : vector<8x128xf32>
    %106 = vector.extract_strided_slice %101 {offsets = [0, 0], sizes = [8, 128], strides = [1, 1]} : vector<8x256xf32> to vector<8x128xf32>
    %107 = arith.negf %106 : vector<8x128xf32>
    %108 = math.exp %107 : vector<8x128xf32>
    %cst_36 = arith.constant 1.000000e+00 : f32
    %109 = vector.broadcast %cst_36 : f32 to vector<8x128xf32>
    %110 = arith.addf %109, %108 : vector<8x128xf32>
    %111 = arith.divf %109, %110 : vector<8x128xf32>
    %112 = math.tanh %106 : vector<8x128xf32>
    %c96_i32_37 = arith.constant 96 : i32
    %113 = tpu.dynamic_rotate %111 by %c96_i32_37 dim 1 : vector<8x128xf32>, i32 -> vector<8x128xf32>
    %c64_i32_38 = arith.constant 64 : i32
    %114 = tpu.dynamic_rotate %112 by %c64_i32_38 dim 1 : vector<8x128xf32>, i32 -> vector<8x128xf32>
    %c32_i32_39 = arith.constant 32 : i32
    %115 = tpu.dynamic_rotate %111 by %c32_i32_39 dim 1 : vector<8x128xf32>, i32 -> vector<8x128xf32>
    %116 = arith.mulf %113, %94 : vector<8x128xf32>
    %117 = arith.mulf %111, %114 : vector<8x128xf32>
    %118 = arith.addf %116, %117 : vector<8x128xf32>
    %119 = math.tanh %118 : vector<8x128xf32>
    %120 = arith.mulf %115, %119 : vector<8x128xf32>
    %c5 = arith.constant 5 : index
    %c0_40 = arith.constant 0 : index
    %c0_41 = arith.constant 0 : index
    %121 = vector.load %arg0[%c5, %c0_40, %c0_41] : memref<8x8x128xf32, #tpu.memory_space<vmem>>, vector<1x8x128xf32>
    %122 = vector.shape_cast %121 : vector<1x8x128xf32> to vector<8x128xf32>
    %123 = arith.select %3, %120, %122 : vector<8x128xi1>, vector<8x128xf32>
    %124 = arith.truncf %123 : vector<8x128xf32> to vector<8x128xbf16>
    %cst_42 = arith.constant dense<0.000000e+00> : vector<8x256xf32>
    %125 = tpu.matmul %124, %0, %cst_42 {dimension_numbers = #tpu.dot_dimension_numbers<[1], [0], [0], [1], [0, 0, 1, 1], [], []>} : vector<8x128xbf16>, vector<128x256xbf16>, vector<8x256xf32> -> vector<8x256xf32>
    %126 = vector.extract_strided_slice %125 {offsets = [0, 128], sizes = [8, 128], strides = [1, 1]} : vector<8x256xf32> to vector<8x128xf32>
    %cst_43 = arith.constant 0.000000e+00 : f32
    %127 = vector.broadcast %cst_43 : f32 to vector<8x128xf32>
    %128 = arith.maximumf %126, %127 : vector<8x128xf32>
    %129 = arith.addf %105, %128 : vector<8x128xf32>
    %130 = vector.extract_strided_slice %125 {offsets = [0, 0], sizes = [8, 128], strides = [1, 1]} : vector<8x256xf32> to vector<8x128xf32>
    %131 = arith.negf %130 : vector<8x128xf32>
    %132 = math.exp %131 : vector<8x128xf32>
    %cst_44 = arith.constant 1.000000e+00 : f32
    %133 = vector.broadcast %cst_44 : f32 to vector<8x128xf32>
    %134 = arith.addf %133, %132 : vector<8x128xf32>
    %135 = arith.divf %133, %134 : vector<8x128xf32>
    %136 = math.tanh %130 : vector<8x128xf32>
    %c96_i32_45 = arith.constant 96 : i32
    %137 = tpu.dynamic_rotate %135 by %c96_i32_45 dim 1 : vector<8x128xf32>, i32 -> vector<8x128xf32>
    %c64_i32_46 = arith.constant 64 : i32
    %138 = tpu.dynamic_rotate %136 by %c64_i32_46 dim 1 : vector<8x128xf32>, i32 -> vector<8x128xf32>
    %c32_i32_47 = arith.constant 32 : i32
    %139 = tpu.dynamic_rotate %135 by %c32_i32_47 dim 1 : vector<8x128xf32>, i32 -> vector<8x128xf32>
    %140 = arith.mulf %137, %118 : vector<8x128xf32>
    %141 = arith.mulf %135, %138 : vector<8x128xf32>
    %142 = arith.addf %140, %141 : vector<8x128xf32>
    %143 = math.tanh %142 : vector<8x128xf32>
    %144 = arith.mulf %139, %143 : vector<8x128xf32>
    %c6 = arith.constant 6 : index
    %c0_48 = arith.constant 0 : index
    %c0_49 = arith.constant 0 : index
    %145 = vector.load %arg0[%c6, %c0_48, %c0_49] : memref<8x8x128xf32, #tpu.memory_space<vmem>>, vector<1x8x128xf32>
    %146 = vector.shape_cast %145 : vector<1x8x128xf32> to vector<8x128xf32>
    %147 = arith.select %3, %144, %146 : vector<8x128xi1>, vector<8x128xf32>
    %148 = arith.truncf %147 : vector<8x128xf32> to vector<8x128xbf16>
    %cst_50 = arith.constant dense<0.000000e+00> : vector<8x256xf32>
    %149 = tpu.matmul %148, %0, %cst_50 {dimension_numbers = #tpu.dot_dimension_numbers<[1], [0], [0], [1], [0, 0, 1, 1], [], []>} : vector<8x128xbf16>, vector<128x256xbf16>, vector<8x256xf32> -> vector<8x256xf32>
    %150 = vector.extract_strided_slice %149 {offsets = [0, 128], sizes = [8, 128], strides = [1, 1]} : vector<8x256xf32> to vector<8x128xf32>
    %cst_51 = arith.constant 0.000000e+00 : f32
    %151 = vector.broadcast %cst_51 : f32 to vector<8x128xf32>
    %152 = arith.maximumf %150, %151 : vector<8x128xf32>
    %153 = arith.addf %129, %152 : vector<8x128xf32>
    %154 = vector.extract_strided_slice %149 {offsets = [0, 0], sizes = [8, 128], strides = [1, 1]} : vector<8x256xf32> to vector<8x128xf32>
    %155 = arith.negf %154 : vector<8x128xf32>
    %156 = math.exp %155 : vector<8x128xf32>
    %cst_52 = arith.constant 1.000000e+00 : f32
    %157 = vector.broadcast %cst_52 : f32 to vector<8x128xf32>
    %158 = arith.addf %157, %156 : vector<8x128xf32>
    %159 = arith.divf %157, %158 : vector<8x128xf32>
    %160 = math.tanh %154 : vector<8x128xf32>
    %c96_i32_53 = arith.constant 96 : i32
    %161 = tpu.dynamic_rotate %159 by %c96_i32_53 dim 1 : vector<8x128xf32>, i32 -> vector<8x128xf32>
    %c64_i32_54 = arith.constant 64 : i32
    %162 = tpu.dynamic_rotate %160 by %c64_i32_54 dim 1 : vector<8x128xf32>, i32 -> vector<8x128xf32>
    %c32_i32_55 = arith.constant 32 : i32
    %163 = tpu.dynamic_rotate %159 by %c32_i32_55 dim 1 : vector<8x128xf32>, i32 -> vector<8x128xf32>
    %164 = arith.mulf %161, %142 : vector<8x128xf32>
    %165 = arith.mulf %159, %162 : vector<8x128xf32>
    %166 = arith.addf %164, %165 : vector<8x128xf32>
    %167 = math.tanh %166 : vector<8x128xf32>
    %168 = arith.mulf %163, %167 : vector<8x128xf32>
    %c7 = arith.constant 7 : index
    %c0_56 = arith.constant 0 : index
    %c0_57 = arith.constant 0 : index
    %169 = vector.load %arg0[%c7, %c0_56, %c0_57] : memref<8x8x128xf32, #tpu.memory_space<vmem>>, vector<1x8x128xf32>
    %170 = vector.shape_cast %169 : vector<1x8x128xf32> to vector<8x128xf32>
    %171 = arith.select %3, %168, %170 : vector<8x128xi1>, vector<8x128xf32>
    %172 = arith.truncf %171 : vector<8x128xf32> to vector<8x128xbf16>
    %cst_58 = arith.constant dense<0.000000e+00> : vector<8x256xf32>
    %173 = tpu.matmul %172, %0, %cst_58 {dimension_numbers = #tpu.dot_dimension_numbers<[1], [0], [0], [1], [0, 0, 1, 1], [], []>} : vector<8x128xbf16>, vector<128x256xbf16>, vector<8x256xf32> -> vector<8x256xf32>
    %174 = vector.extract_strided_slice %173 {offsets = [0, 128], sizes = [8, 128], strides = [1, 1]} : vector<8x256xf32> to vector<8x128xf32>
    %cst_59 = arith.constant 0.000000e+00 : f32
    %175 = vector.broadcast %cst_59 : f32 to vector<8x128xf32>
    %176 = arith.maximumf %174, %175 : vector<8x128xf32>
    %177 = arith.addf %153, %176 : vector<8x128xf32>
    %178 = vector.extract_strided_slice %173 {offsets = [0, 0], sizes = [8, 128], strides = [1, 1]} : vector<8x256xf32> to vector<8x128xf32>
    %179 = arith.negf %178 : vector<8x128xf32>
    %180 = math.exp %179 : vector<8x128xf32>
    %cst_60 = arith.constant 1.000000e+00 : f32
    %181 = vector.broadcast %cst_60 : f32 to vector<8x128xf32>
    %182 = arith.addf %181, %180 : vector<8x128xf32>
    %183 = arith.divf %181, %182 : vector<8x128xf32>
    %184 = math.tanh %178 : vector<8x128xf32>
    %c96_i32_61 = arith.constant 96 : i32
    %185 = tpu.dynamic_rotate %183 by %c96_i32_61 dim 1 : vector<8x128xf32>, i32 -> vector<8x128xf32>
    %c64_i32_62 = arith.constant 64 : i32
    %186 = tpu.dynamic_rotate %184 by %c64_i32_62 dim 1 : vector<8x128xf32>, i32 -> vector<8x128xf32>
    %c32_i32_63 = arith.constant 32 : i32
    %187 = tpu.dynamic_rotate %183 by %c32_i32_63 dim 1 : vector<8x128xf32>, i32 -> vector<8x128xf32>
    %188 = arith.mulf %185, %166 : vector<8x128xf32>
    %189 = arith.mulf %183, %186 : vector<8x128xf32>
    %190 = arith.addf %188, %189 : vector<8x128xf32>
    %191 = math.tanh %190 : vector<8x128xf32>
    %192 = arith.mulf %187, %191 : vector<8x128xf32>
    %c0_64 = arith.constant 0 : index
    %c0_65 = arith.constant 0 : index
    %c0_66 = arith.constant 0 : index
    %193 = vector.load %arg0[%c0_64, %c0_65, %c0_66] : memref<8x8x128xf32, #tpu.memory_space<vmem>>, vector<1x8x128xf32>
    %194 = vector.shape_cast %193 : vector<1x8x128xf32> to vector<8x128xf32>
    %195 = arith.select %3, %192, %194 : vector<8x128xi1>, vector<8x128xf32>
    %196 = arith.truncf %195 : vector<8x128xf32> to vector<8x128xbf16>
    %cst_67 = arith.constant dense<0.000000e+00> : vector<8x256xf32>
    %197 = tpu.matmul %196, %0, %cst_67 {dimension_numbers = #tpu.dot_dimension_numbers<[1], [0], [0], [1], [0, 0, 1, 1], [], []>} : vector<8x128xbf16>, vector<128x256xbf16>, vector<8x256xf32> -> vector<8x256xf32>
    %198 = vector.extract_strided_slice %197 {offsets = [0, 128], sizes = [8, 128], strides = [1, 1]} : vector<8x256xf32> to vector<8x128xf32>
    %cst_68 = arith.constant 0.000000e+00 : f32
    %199 = vector.broadcast %cst_68 : f32 to vector<8x128xf32>
    %200 = arith.maximumf %198, %199 : vector<8x128xf32>
    %201 = arith.addf %177, %200 : vector<8x128xf32>
    %cst_69 = arith.constant 1.250000e-01 : f32
    %202 = vector.broadcast %cst_69 : f32 to vector<8x128xf32>
    %203 = arith.mulf %201, %202 : vector<8x128xf32>
    %c32_i32_70 = arith.constant 32 : i32
    %204 = vector.broadcast %c32_i32_70 : i32 to vector<8x128xi32>
    %205 = arith.cmpi eq, %1, %204 : vector<8x128xi32>
    %cst_71 = arith.constant 1.000000e+00 : f32
    %206 = vector.broadcast %cst_71 : f32 to vector<8x128xf32>
    %207 = arith.select %205, %206, %203 : vector<8x128xi1>, vector<8x128xf32>
    %208 = arith.truncf %207 : vector<8x128xf32> to vector<8x128xbf16>
    %c0_72 = arith.constant 0 : index
    %c0_73 = arith.constant 0 : index
    %209 = vector.load %arg2[%c0_72, %c0_73] : memref<128x8xf32, #tpu.memory_space<vmem>>, vector<128x8xf32>
    %210 = arith.truncf %209 : vector<128x8xf32> to vector<128x8xbf16>
    %cst_74 = arith.constant dense<0.000000e+00> : vector<8x8xf32>
    %211 = tpu.matmul %208, %210, %cst_74 {dimension_numbers = #tpu.dot_dimension_numbers<[1], [0], [0], [1], [0, 0, 1, 1], [], []>} : vector<8x128xbf16>, vector<128x8xbf16>, vector<8x8xf32> -> vector<8x8xf32>
    %c0_75 = arith.constant 0 : index
    %c0_76 = arith.constant 0 : index
    %212 = vector.load %arg3[%c0_75, %c0_76] : memref<8x8xf32, #tpu.memory_space<vmem>>, vector<8x8xf32>
    tpu.vector_store %arg3[%c0_75, %c0_76], %211 {strides = array<i32>} : memref<8x8xf32, #tpu.memory_space<vmem>>, vector<8x8xf32>,
    return
  }
}

</mosaic_0001>

<llo_original>
// kernel: lstm_classifier_forward.1
$region0: #{lstm_classifier_forward.1}
  #allocation0 [shape = 'u32[]', space=smem, size = 0x4, offset = 0x4, fixed_abs, tag = 'smem constant byte address 0x4 - core index']
  #allocation1 [shape = 'u32[144,128]{1,0:T(1,128)}', space=vmem, size = 0x12000, scoped, tag = 'internal scratch']
  %s0 = inlined_call_operand.vmem [shape: f32[8,8,128], index: 0, kind: input, shape index: {}]
  %s1 = inlined_call_operand.vmem [shape: bf16[128,256], index: 1, kind: input, shape index: {}]
  %s2 = inlined_call_operand.vmem [shape: f32[128,8], index: 2, kind: input, shape index: {}]
  %s3 = inlined_call_operand.vmem [shape: f32[8,8], index: 3, kind: output, shape index: {}]
  %s4 = sld [smem:[#allocation0]]
  $region22: #{lstm_classifier_forward.1} parent=0
    _
  %s6 = ssub.s32 1, %s4
  %s7 = scalar_select 0, %s6, %s4
  // Predicated region
  $region2: #{lstm_classifier_forward.1} parent=0 // pred_check
    _
  $region3: #{lstm_classifier_forward.1} parent=0 // pred_check_branch
    %9 = sbr.rel (0) target = $region5
  $region4: #{lstm_classifier_forward.1} parent=0 // pred_region
    _
  $region5: #{lstm_classifier_forward.1} parent=0 // pred_fallthru
    _
  // Predicated region
  $region6: #{lstm_classifier_forward.1} parent=0 // pred_check
    _
  $region7: #{lstm_classifier_forward.1} parent=0 // pred_check_branch
    %11 = sbr.rel (0) target = $region9
  $region8: #{lstm_classifier_forward.1} parent=0 // pred_region
    _
  $region9: #{lstm_classifier_forward.1} parent=0 // pred_fallthru
    _
  // Predicated region
  $region10: #{lstm_classifier_forward.1} parent=0 // pred_check
    _
  $region11: #{lstm_classifier_forward.1} parent=0 // pred_check_branch
    %13 = sbr.rel (0) target = $region13
  $region12: #{lstm_classifier_forward.1} parent=0 // pred_region
    _
  $region13: #{lstm_classifier_forward.1} parent=0 // pred_fallthru
    _
  %v15 = vld [vmem:[%s1] sm:$0xff]
  %v16 = vld [vmem:[%s1 + $0x8] sm:$0xff]
  %v17 = vld [vmem:[%s1 + $0x10] sm:$0xff]
  %v18 = vld [vmem:[%s1 + $0x18] sm:$0xff]
  %v19 = vld [vmem:[%s1 + $0x20] sm:$0xff]
  %v20 = vld [vmem:[%s1 + $0x28] sm:$0xff]
  %v21 = vld [vmem:[%s1 + $0x30] sm:$0xff]
  %v22 = vld [vmem:[%s1 + $0x38] sm:$0xff]
  %v23 = vld [vmem:[%s1 + $0x40] sm:$0xff]
  %v24 = vld [vmem:[%s1 + $0x48] sm:$0xff]
  %v25 = vld [vmem:[%s1 + $0x50] sm:$0xff]
  %v26 = vld [vmem:[%s1 + $0x58] sm:$0xff]
  %v27 = vld [vmem:[%s1 + $0x60] sm:$0xff]
  %v28 = vld [vmem:[%s1 + $0x68] sm:$0xff]
  %v29 = vld [vmem:[%s1 + $0x70] sm:$0xff]
  %v30 = vld [vmem:[%s1 + $0x78] sm:$0xff]
  %v31 = vlaneseq
  %v32 = vand.u32 %v31, 127
  %vm33 = vcmp.lt.s32.totalorder %v32, 32
  %v34 = vld [vmem:[%s0] sm:$0xff]
  %v35 = vpack.c.bf16 %v34, %v34
  %v52 = vunpack.c.l.b16 %v15
  %v53 = vunpack.c.h.b16 %v15
  %v54 = vunpack.c.l.b16 %v16
  %v55 = vunpack.c.h.b16 %v16
  %v56 = vunpack.c.l.b16 %v17
  %v57 = vunpack.c.h.b16 %v17
  %v58 = vunpack.c.l.b16 %v18
  %v59 = vunpack.c.h.b16 %v18
  %v60 = vunpack.c.l.b16 %v19
  %v61 = vunpack.c.h.b16 %v19
  %v62 = vunpack.c.l.b16 %v20
  %v63 = vunpack.c.h.b16 %v20
  %v64 = vunpack.c.l.b16 %v21
  %v65 = vunpack.c.h.b16 %v21
  %v66 = vunpack.c.l.b16 %v22
  %v67 = vunpack.c.h.b16 %v22
  %v68 = vunpack.c.l.b16 %v23
  %v69 = vunpack.c.h.b16 %v23
  %v70 = vunpack.c.l.b16 %v24
  %v71 = vunpack.c.h.b16 %v24
  %v72 = vunpack.c.l.b16 %v25
  %v73 = vunpack.c.h.b16 %v25
  %v74 = vunpack.c.l.b16 %v26
  %v75 = vunpack.c.h.b16 %v26
  %v76 = vunpack.c.l.b16 %v27
  %v77 = vunpack.c.h.b16 %v27
  %v78 = vunpack.c.l.b16 %v28
  %v79 = vunpack.c.h.b16 %v28
  %v80 = vunpack.c.l.b16 %v29
  %v81 = vunpack.c.h.b16 %v29
  %v82 = vunpack.c.l.b16 %v30
  %v83 = vunpack.c.h.b16 %v30
  %v84 = vpack.c.b16 %v54, %v52
  %v85 = vpack.c.b16 %v55, %v53
  %v86 = vpack.c.b16 %v58, %v56
  %v87 = vpack.c.b16 %v59, %v57
  %v88 = vpack.c.b16 %v62, %v60
  %v89 = vpack.c.b16 %v63, %v61
  %v90 = vpack.c.b16 %v66, %v64
  %v91 = vpack.c.b16 %v67, %v65
  %v92 = vpack.c.b16 %v70, %v68
  %v93 = vpack.c.b16 %v71, %v69
  %v94 = vpack.c.b16 %v74, %v72
  %v95 = vpack.c.b16 %v75, %v73
  %v96 = vpack.c.b16 %v78, %v76
  %v97 = vpack.c.b16 %v79, %v77
  %v98 = vpack.c.b16 %v82, %v80
  %v99 = vpack.c.b16 %v83, %v81
  %116 = vmatprep.subr.bf16.mxu0 %v99
  %117 = vmatpush1.bf16.msra.mxu0 %v98
  %118 = vmatprep.subr.bf16.mxu0 %v97
  %119 = vmatpush1.bf16.msra.mxu0 %v96
  %120 = vmatprep.subr.bf16.mxu0 %v95
  %121 = vmatpush1.bf16.msra.mxu0 %v94
  %122 = vmatprep.subr.bf16.mxu0 %v93
  %123 = vmatpush1.bf16.msra.mxu0 %v92
  %124 = vmatprep.subr.bf16.mxu0 %v91
  %125 = vmatpush1.bf16.msra.mxu0 %v90
  %126 = vmatprep.subr.bf16.mxu0 %v89
  %127 = vmatpush1.bf16.msra.mxu0 %v88
  %128 = vmatprep.subr.bf16.mxu0 %v87
  %129 = vmatpush1.bf16.msra.mxu0 %v86
  %130 = vmatprep.subr.bf16.mxu0 %v85
  %131 = vmatpush1.bf16.msra.mxu0 %v84
  %132 = vmatprep.subr.bf16.mxu0 0
  %133 = vmatpush2.bf16.msra.mxu0 0
  %134 = vmatprep.subr.bf16.mxu0 0
  %135 = vmatpush2.bf16.msra.mxu0 0
  %136 = vmatprep.subr.bf16.mxu0 0
  %137 = vmatpush2.bf16.msra.mxu0 0
  %138 = vmatprep.subr.bf16.mxu0 0
  %139 = vmatpush2.bf16.msra.mxu0 0
  %140 = vmatprep.subr.bf16.mxu0 0
  %141 = vmatpush2.bf16.msra.mxu0 0
  %142 = vmatprep.subr.bf16.mxu0 0
  %143 = vmatpush2.bf16.msra.mxu0 0
  %144 = vmatprep.subr.bf16.mxu0 0
  %145 = vmatpush2.bf16.msra.mxu0 0
  %146 = vmatprep.subr.bf16.mxu0 0
  %147 = vmatpush2.bf16.msra.mxu0 0
  %148 = vmatprep.mubr.bf16.mxu0 0
  %149 = vmatmul.mubr.bf16.gmra.mxu0 %v35
  %v150 = vpop.f32.mrf.mxu0
  %v151 = vadd.f32 0.0, %v150
  %v152 = vpop.f32.mrf.mxu0
  %v153 = vpop.f32.mrf.mxu0
  %v154 = vpop.f32.mrf.mxu0
  %155 = vdwg.mxu0
  %v156 = vxor.u32 %v151, 2147483648
  %v157 = vmul.f32 %v156, 1.442695
  %v158 = vpow.pop %v157
  %v159 = vadd.f32 %v158, 1.0
  %v160 = vrcp.pop %v159
  %v161 = vmul.f32 1.0, %v160
  %v162 = vtanh.pop %v151
  %163 = vrot.lane.b32.xlu0 %v161, 96
  %v164 = vpop.permute.xlu0 %163
  %165 = vrot.lane.b32.xlu0 %v162, 64
  %v166 = vpop.permute.xlu0 %165
  %167 = vrot.lane.b32.xlu0 %v161, 32
  %v168 = vpop.permute.xlu0 %167
  %v169 = vmul.f32 %v164, 0.0
  %v170 = vmul.f32 %v161, %v166
  %v171 = vadd.f32 %v169, %v170
  %v172 = vtanh.pop %v171
  %v173 = vmul.f32 %v168, %v172
  %s174 = scalar_lea.vmem %s0, 8
  %v175 = vld [vmem:[%s174] sm:$0xff]
  %v176 = vsel %vm33, %v173, %v175
  %v177 = vpack.c.bf16 %v176, %v176
  %178 = vmatprep.subr.bf16.mxu0 %v99
  %179 = vmatpush1.bf16.msra.mxu0 %v98
  %180 = vmatprep.subr.bf16.mxu0 %v97
  %181 = vmatpush1.bf16.msra.mxu0 %v96
  %182 = vmatprep.subr.bf16.mxu0 %v95
  %183 = vmatpush1.bf16.msra.mxu0 %v94
  %184 = vmatprep.subr.bf16.mxu0 %v93
  %185 = vmatpush1.bf16.msra.mxu0 %v92
  %186 = vmatprep.subr.bf16.mxu0 %v91
  %187 = vmatpush1.bf16.msra.mxu0 %v90
  %188 = vmatprep.subr.bf16.mxu0 %v89
  %189 = vmatpush1.bf16.msra.mxu0 %v88
  %190 = vmatprep.subr.bf16.mxu0 %v87
  %191 = vmatpush1.bf16.msra.mxu0 %v86
  %192 = vmatprep.subr.bf16.mxu0 %v85
  %193 = vmatpush1.bf16.msra.mxu0 %v84
  %194 = vmatprep.subr.bf16.mxu0 0
  %195 = vmatpush2.bf16.msra.mxu0 0
  %196 = vmatprep.subr.bf16.mxu0 0
  %197 = vmatpush2.bf16.msra.mxu0 0
  %198 = vmatprep.subr.bf16.mxu0 0
  %199 = vmatpush2.bf16.msra.mxu0 0
  %200 = vmatprep.subr.bf16.mxu0 0
  %201 = vmatpush2.bf16.msra.mxu0 0
  %202 = vmatprep.subr.bf16.mxu0 0
  %203 = vmatpush2.bf16.msra.mxu0 0
  %204 = vmatprep.subr.bf16.mxu0 0
  %205 = vmatpush2.bf16.msra.mxu0 0
  %206 = vmatprep.subr.bf16.mxu0 0
  %207 = vmatpush2.bf16.msra.mxu0 0
  %208 = vmatprep.subr.bf16.mxu0 0
  %209 = vmatpush2.bf16.msra.mxu0 0
  %210 = vmatprep.mubr.bf16.mxu0 0
  %211 = vmatmul.mubr.bf16.gmra.mxu0 %v177
  %v212 = vpop.f32.mrf.mxu0
  %v213 = vadd.f32 0.0, %v212
  %v214 = vpop.f32.mrf.mxu0
  %v215 = vadd.f32 0.0, %v214
  %v216 = vpop.f32.mrf.mxu0
  %v217 = vpop.f32.mrf.mxu0
  %218 = vdwg.mxu0
  %v219 = vmax.f32 %v215, 0.0
  %v220 = vadd.f32 %v219, 0.0
  %v221 = vxor.u32 %v213, 2147483648
  %v222 = vmul.f32 %v221, 1.442695
  %v223 = vpow.pop %v222
  %v224 = vadd.f32 %v223, 1.0
  %v225 = vrcp.pop %v224
  %v226 = vmul.f32 1.0, %v225
  %v227 = vtanh.pop %v213
  %228 = vrot.lane.b32.xlu0 %v226, 96
  %v229 = vpop.permute.xlu0 %228
  %230 = vrot.lane.b32.xlu0 %v227, 64
  %v231 = vpop.permute.xlu0 %230
  %232 = vrot.lane.b32.xlu0 %v226, 32
  %v233 = vpop.permute.xlu0 %232
  %v234 = vmul.f32 %v229, %v171
  %v235 = vmul.f32 %v226, %v231
  %v236 = vadd.f32 %v234, %v235
  %v237 = vtanh.pop %v236
  %v238 = vmul.f32 %v233, %v237
  %s239 = scalar_lea.vmem %s0, 16
  %v240 = vld [vmem:[%s239] sm:$0xff]
  %v241 = vsel %vm33, %v238, %v240
  %v242 = vpack.c.bf16 %v241, %v241
  %243 = vmatprep.subr.bf16.mxu0 %v99
  %244 = vmatpush1.bf16.msra.mxu0 %v98
  %245 = vmatprep.subr.bf16.mxu0 %v97
  %246 = vmatpush1.bf16.msra.mxu0 %v96
  %247 = vmatprep.subr.bf16.mxu0 %v95
  %248 = vmatpush1.bf16.msra.mxu0 %v94
  %249 = vmatprep.subr.bf16.mxu0 %v93
  %250 = vmatpush1.bf16.msra.mxu0 %v92
  %251 = vmatprep.subr.bf16.mxu0 %v91
  %252 = vmatpush1.bf16.msra.mxu0 %v90
  %253 = vmatprep.subr.bf16.mxu0 %v89
  %254 = vmatpush1.bf16.msra.mxu0 %v88
  %255 = vmatprep.subr.bf16.mxu0 %v87
  %256 = vmatpush1.bf16.msra.mxu0 %v86
  %257 = vmatprep.subr.bf16.mxu0 %v85
  %258 = vmatpush1.bf16.msra.mxu0 %v84
  %259 = vmatprep.subr.bf16.mxu0 0
  %260 = vmatpush2.bf16.msra.mxu0 0
  %261 = vmatprep.subr.bf16.mxu0 0
  %262 = vmatpush2.bf16.msra.mxu0 0
  %263 = vmatprep.subr.bf16.mxu0 0
  %264 = vmatpush2.bf16.msra.mxu0 0
  %265 = vmatprep.subr.bf16.mxu0 0
  %266 = vmatpush2.bf16.msra.mxu0 0
  %267 = vmatprep.subr.bf16.mxu0 0
  %268 = vmatpush2.bf16.msra.mxu0 0
  %269 = vmatprep.subr.bf16.mxu0 0
  %270 = vmatpush2.bf16.msra.mxu0 0
  %271 = vmatprep.subr.bf16.mxu0 0
  %272 = vmatpush2.bf16.msra.mxu0 0
  %273 = vmatprep.subr.bf16.mxu0 0
  %274 = vmatpush2.bf16.msra.mxu0 0
  %275 = vmatprep.mubr.bf16.mxu0 0
  %276 = vmatmul.mubr.bf16.gmra.mxu0 %v242
  %v277 = vpop.f32.mrf.mxu0
  %v278 = vadd.f32 0.0, %v277
  %v279 = vpop.f32.mrf.mxu0
  %v280 = vadd.f32 0.0, %v279
  %v281 = vpop.f32.mrf.mxu0
  %v282 = vpop.f32.mrf.mxu0
  %283 = vdwg.mxu0
  %v284 = vmax.f32 %v280, 0.0
  %v285 = vadd.f32 %v220, %v284
  %v286 = vxor.u32 %v278, 2147483648
  %v287 = vmul.f32 %v286, 1.442695
  %v288 = vpow.pop %v287
  %v289 = vadd.f32 %v288, 1.0
  %v290 = vrcp.pop %v289
  %v291 = vmul.f32 1.0, %v290
  %v292 = vtanh.pop %v278
  %293 = vrot.lane.b32.xlu0 %v291, 96
  %v294 = vpop.permute.xlu0 %293
  %295 = vrot.lane.b32.xlu0 %v292, 64
  %v296 = vpop.permute.xlu0 %295
  %297 = vrot.lane.b32.xlu0 %v291, 32
  %v298 = vpop.permute.xlu0 %297
  %v299 = vmul.f32 %v294, %v236
  %v300 = vmul.f32 %v291, %v296
  %v301 = vadd.f32 %v299, %v300
  %v302 = vtanh.pop %v301
  %v303 = vmul.f32 %v298, %v302
  %s304 = scalar_lea.vmem %s0, 24
  %v305 = vld [vmem:[%s304] sm:$0xff]
  %v306 = vsel %vm33, %v303, %v305
  %v307 = vpack.c.bf16 %v306, %v306
  %308 = vmatprep.subr.bf16.mxu0 %v99
  %309 = vmatpush1.bf16.msra.mxu0 %v98
  %310 = vmatprep.subr.bf16.mxu0 %v97
  %311 = vmatpush1.bf16.msra.mxu0 %v96
  %312 = vmatprep.subr.bf16.mxu0 %v95
  %313 = vmatpush1.bf16.msra.mxu0 %v94
  %314 = vmatprep.subr.bf16.mxu0 %v93
  %315 = vmatpush1.bf16.msra.mxu0 %v92
  %316 = vmatprep.subr.bf16.mxu0 %v91
  %317 = vmatpush1.bf16.msra.mxu0 %v90
  %318 = vmatprep.subr.bf16.mxu0 %v89
  %319 = vmatpush1.bf16.msra.mxu0 %v88
  %320 = vmatprep.subr.bf16.mxu0 %v87
  %321 = vmatpush1.bf16.msra.mxu0 %v86
  %322 = vmatprep.subr.bf16.mxu0 %v85
  %323 = vmatpush1.bf16.msra.mxu0 %v84
  %324 = vmatprep.subr.bf16.mxu0 0
  %325 = vmatpush2.bf16.msra.mxu0 0
  %326 = vmatprep.subr.bf16.mxu0 0
  %327 = vmatpush2.bf16.msra.mxu0 0
  %328 = vmatprep.subr.bf16.mxu0 0
  %329 = vmatpush2.bf16.msra.mxu0 0
  %330 = vmatprep.subr.bf16.mxu0 0
  %331 = vmatpush2.bf16.msra.mxu0 0
  %332 = vmatprep.subr.bf16.mxu0 0
  %333 = vmatpush2.bf16.msra.mxu0 0
  %334 = vmatprep.subr.bf16.mxu0 0
  %335 = vmatpush2.bf16.msra.mxu0 0
  %336 = vmatprep.subr.bf16.mxu0 0
  %337 = vmatpush2.bf16.msra.mxu0 0
  %338 = vmatprep.subr.bf16.mxu0 0
  %339 = vmatpush2.bf16.msra.mxu0 0
  %340 = vmatprep.mubr.bf16.mxu0 0
  %341 = vmatmul.mubr.bf16.gmra.mxu0 %v307
  %v342 = vpop.f32.mrf.mxu0
  %v343 = vadd.f32 0.0, %v342
  %v344 = vpop.f32.mrf.mxu0
  %v345 = vadd.f32 0.0, %v344
  %v346 = vpop.f32.mrf.mxu0
  %v347 = vpop.f32.mrf.mxu0
  %348 = vdwg.mxu0
  %v349 = vmax.f32 %v345, 0.0
  %v350 = vadd.f32 %v285, %v349
  %v351 = vxor.u32 %v343, 2147483648
  %v352 = vmul.f32 %v351, 1.442695
  %v353 = vpow.pop %v352
  %v354 = vadd.f32 %v353, 1.0
  %v355 = vrcp.pop %v354
  %v356 = vmul.f32 1.0, %v355
  %v357 = vtanh.pop %v343
  %358 = vrot.lane.b32.xlu0 %v356, 96
  %v359 = vpop.permute.xlu0 %358
  %360 = vrot.lane.b32.xlu0 %v357, 64
  %v361 = vpop.permute.xlu0 %360
  %362 = vrot.lane.b32.xlu0 %v356, 32
  %v363 = vpop.permute.xlu0 %362
  %v364 = vmul.f32 %v359, %v301
  %v365 = vmul.f32 %v356, %v361
  %v366 = vadd.f32 %v364, %v365
  %v367 = vtanh.pop %v366
  %v368 = vmul.f32 %v363, %v367
  %s369 = scalar_lea.vmem %s0, 32
  %v370 = vld [vmem:[%s369] sm:$0xff]
  %v371 = vsel %vm33, %v368, %v370
  %v372 = vpack.c.bf16 %v371, %v371
  %373 = vmatprep.subr.bf16.mxu0 %v99
  %374 = vmatpush1.bf16.msra.mxu0 %v98
  %375 = vmatprep.subr.bf16.mxu0 %v97
  %376 = vmatpush1.bf16.msra.mxu0 %v96
  %377 = vmatprep.subr.bf16.mxu0 %v95
  %378 = vmatpush1.bf16.msra.mxu0 %v94
  %379 = vmatprep.subr.bf16.mxu0 %v93
  %380 = vmatpush1.bf16.msra.mxu0 %v92
  %381 = vmatprep.subr.bf16.mxu0 %v91
  %382 = vmatpush1.bf16.msra.mxu0 %v90
  %383 = vmatprep.subr.bf16.mxu0 %v89
  %384 = vmatpush1.bf16.msra.mxu0 %v88
  %385 = vmatprep.subr.bf16.mxu0 %v87
  %386 = vmatpush1.bf16.msra.mxu0 %v86
  %387 = vmatprep.subr.bf16.mxu0 %v85
  %388 = vmatpush1.bf16.msra.mxu0 %v84
  %389 = vmatprep.subr.bf16.mxu0 0
  %390 = vmatpush2.bf16.msra.mxu0 0
  %391 = vmatprep.subr.bf16.mxu0 0
  %392 = vmatpush2.bf16.msra.mxu0 0
  %393 = vmatprep.subr.bf16.mxu0 0
  %394 = vmatpush2.bf16.msra.mxu0 0
  %395 = vmatprep.subr.bf16.mxu0 0
  %396 = vmatpush2.bf16.msra.mxu0 0
  %397 = vmatprep.subr.bf16.mxu0 0
  %398 = vmatpush2.bf16.msra.mxu0 0
  %399 = vmatprep.subr.bf16.mxu0 0
  %400 = vmatpush2.bf16.msra.mxu0 0
  %401 = vmatprep.subr.bf16.mxu0 0
  %402 = vmatpush2.bf16.msra.mxu0 0
  %403 = vmatprep.subr.bf16.mxu0 0
  %404 = vmatpush2.bf16.msra.mxu0 0
  %405 = vmatprep.mubr.bf16.mxu0 0
  %406 = vmatmul.mubr.bf16.gmra.mxu0 %v372
  %v407 = vpop.f32.mrf.mxu0
  %v408 = vadd.f32 0.0, %v407
  %v409 = vpop.f32.mrf.mxu0
  %v410 = vadd.f32 0.0, %v409
  %v411 = vpop.f32.mrf.mxu0
  %v412 = vpop.f32.mrf.mxu0
  %413 = vdwg.mxu0
  %v414 = vmax.f32 %v410, 0.0
  %v415 = vadd.f32 %v350, %v414
  %v416 = vxor.u32 %v408, 2147483648
  %v417 = vmul.f32 %v416, 1.442695
  %v418 = vpow.pop %v417
  %v419 = vadd.f32 %v418, 1.0
  %v420 = vrcp.pop %v419
  %v421 = vmul.f32 1.0, %v420
  %v422 = vtanh.pop %v408
  %423 = vrot.lane.b32.xlu0 %v421, 96
  %v424 = vpop.permute.xlu0 %423
  %425 = vrot.lane.b32.xlu0 %v422, 64
  %v426 = vpop.permute.xlu0 %425
  %427 = vrot.lane.b32.xlu0 %v421, 32
  %v428 = vpop.permute.xlu0 %427
  %v429 = vmul.f32 %v424, %v366
  %v430 = vmul.f32 %v421, %v426
  %v431 = vadd.f32 %v429, %v430
  %v432 = vtanh.pop %v431
  %v433 = vmul.f32 %v428, %v432
  %s434 = scalar_lea.vmem %s0, 40
  %v435 = vld [vmem:[%s434] sm:$0xff]
  %v436 = vsel %vm33, %v433, %v435
  %v437 = vpack.c.bf16 %v436, %v436
  %438 = vmatprep.subr.bf16.mxu0 %v99
  %439 = vmatpush1.bf16.msra.mxu0 %v98
  %440 = vmatprep.subr.bf16.mxu0 %v97
  %441 = vmatpush1.bf16.msra.mxu0 %v96
  %442 = vmatprep.subr.bf16.mxu0 %v95
  %443 = vmatpush1.bf16.msra.mxu0 %v94
  %444 = vmatprep.subr.bf16.mxu0 %v93
  %445 = vmatpush1.bf16.msra.mxu0 %v92
  %446 = vmatprep.subr.bf16.mxu0 %v91
  %447 = vmatpush1.bf16.msra.mxu0 %v90
  %448 = vmatprep.subr.bf16.mxu0 %v89
  %449 = vmatpush1.bf16.msra.mxu0 %v88
  %450 = vmatprep.subr.bf16.mxu0 %v87
  %451 = vmatpush1.bf16.msra.mxu0 %v86
  %452 = vmatprep.subr.bf16.mxu0 %v85
  %453 = vmatpush1.bf16.msra.mxu0 %v84
  %454 = vmatprep.subr.bf16.mxu0 0
  %455 = vmatpush2.bf16.msra.mxu0 0
  %456 = vmatprep.subr.bf16.mxu0 0
  %457 = vmatpush2.bf16.msra.mxu0 0
  %458 = vmatprep.subr.bf16.mxu0 0
  %459 = vmatpush2.bf16.msra.mxu0 0
  %460 = vmatprep.subr.bf16.mxu0 0
  %461 = vmatpush2.bf16.msra.mxu0 0
  %462 = vmatprep.subr.bf16.mxu0 0
  %463 = vmatpush2.bf16.msra.mxu0 0
  %464 = vmatprep.subr.bf16.mxu0 0
  %465 = vmatpush2.bf16.msra.mxu0 0
  %466 = vmatprep.subr.bf16.mxu0 0
  %467 = vmatpush2.bf16.msra.mxu0 0
  %468 = vmatprep.subr.bf16.mxu0 0
  %469 = vmatpush2.bf16.msra.mxu0 0
  %470 = vmatprep.mubr.bf16.mxu0 0
  %471 = vmatmul.mubr.bf16.gmra.mxu0 %v437
  %v472 = vpop.f32.mrf.mxu0
  %v473 = vadd.f32 0.0, %v472
  %v474 = vpop.f32.mrf.mxu0
  %v475 = vadd.f32 0.0, %v474
  %v476 = vpop.f32.mrf.mxu0
  %v477 = vpop.f32.mrf.mxu0
  %478 = vdwg.mxu0
  %v479 = vmax.f32 %v475, 0.0
  %v480 = vadd.f32 %v415, %v479
  %v481 = vxor.u32 %v473, 2147483648
  %v482 = vmul.f32 %v481, 1.442695
  %v483 = vpow.pop %v482
  %v484 = vadd.f32 %v483, 1.0
  %v485 = vrcp.pop %v484
  %v486 = vmul.f32 1.0, %v485
  %v487 = vtanh.pop %v473
  %488 = vrot.lane.b32.xlu0 %v486, 96
  %v489 = vpop.permute.xlu0 %488
  %490 = vrot.lane.b32.xlu0 %v487, 64
  %v491 = vpop.permute.xlu0 %490
  %492 = vrot.lane.b32.xlu0 %v486, 32
  %v493 = vpop.permute.xlu0 %492
  %v494 = vmul.f32 %v489, %v431
  %v495 = vmul.f32 %v486, %v491
  %v496 = vadd.f32 %v494, %v495
  %v497 = vtanh.pop %v496
  %v498 = vmul.f32 %v493, %v497
  %s499 = scalar_lea.vmem %s0, 48
  %v500 = vld [vmem:[%s499] sm:$0xff]
  %v501 = vsel %vm33, %v498, %v500
  %v502 = vpack.c.bf16 %v501, %v501
  %503 = vmatprep.subr.bf16.mxu0 %v99
  %504 = vmatpush1.bf16.msra.mxu0 %v98
  %505 = vmatprep.subr.bf16.mxu0 %v97
  %506 = vmatpush1.bf16.msra.mxu0 %v96
  %507 = vmatprep.subr.bf16.mxu0 %v95
  %508 = vmatpush1.bf16.msra.mxu0 %v94
  %509 = vmatprep.subr.bf16.mxu0 %v93
  %510 = vmatpush1.bf16.msra.mxu0 %v92
  %511 = vmatprep.subr.bf16.mxu0 %v91
  %512 = vmatpush1.bf16.msra.mxu0 %v90
  %513 = vmatprep.subr.bf16.mxu0 %v89
  %514 = vmatpush1.bf16.msra.mxu0 %v88
  %515 = vmatprep.subr.bf16.mxu0 %v87
  %516 = vmatpush1.bf16.msra.mxu0 %v86
  %517 = vmatprep.subr.bf16.mxu0 %v85
  %518 = vmatpush1.bf16.msra.mxu0 %v84
  %519 = vmatprep.subr.bf16.mxu0 0
  %520 = vmatpush2.bf16.msra.mxu0 0
  %521 = vmatprep.subr.bf16.mxu0 0
  %522 = vmatpush2.bf16.msra.mxu0 0
  %523 = vmatprep.subr.bf16.mxu0 0
  %524 = vmatpush2.bf16.msra.mxu0 0
  %525 = vmatprep.subr.bf16.mxu0 0
  %526 = vmatpush2.bf16.msra.mxu0 0
  %527 = vmatprep.subr.bf16.mxu0 0
  %528 = vmatpush2.bf16.msra.mxu0 0
  %529 = vmatprep.subr.bf16.mxu0 0
  %530 = vmatpush2.bf16.msra.mxu0 0
  %531 = vmatprep.subr.bf16.mxu0 0
  %532 = vmatpush2.bf16.msra.mxu0 0
  %533 = vmatprep.subr.bf16.mxu0 0
  %534 = vmatpush2.bf16.msra.mxu0 0
  %535 = vmatprep.mubr.bf16.mxu0 0
  %536 = vmatmul.mubr.bf16.gmra.mxu0 %v502
  %v537 = vpop.f32.mrf.mxu0
  %v538 = vadd.f32 0.0, %v537
  %v539 = vpop.f32.mrf.mxu0
  %v540 = vadd.f32 0.0, %v539
  %v541 = vpop.f32.mrf.mxu0
  %v542 = vpop.f32.mrf.mxu0
  %543 = vdwg.mxu0
  %v544 = vmax.f32 %v540, 0.0
  %v545 = vadd.f32 %v480, %v544
  %v546 = vxor.u32 %v538, 2147483648
  %v547 = vmul.f32 %v546, 1.442695
  %v548 = vpow.pop %v547
  %v549 = vadd.f32 %v548, 1.0
  %v550 = vrcp.pop %v549
  %v551 = vmul.f32 1.0, %v550
  %v552 = vtanh.pop %v538
  %553 = vrot.lane.b32.xlu0 %v551, 96
  %v554 = vpop.permute.xlu0 %553
  %555 = vrot.lane.b32.xlu0 %v552, 64
  %v556 = vpop.permute.xlu0 %555
  %557 = vrot.lane.b32.xlu0 %v551, 32
  %v558 = vpop.permute.xlu0 %557
  %v559 = vmul.f32 %v554, %v496
  %v560 = vmul.f32 %v551, %v556
  %v561 = vadd.f32 %v559, %v560
  %v562 = vtanh.pop %v561
  %v563 = vmul.f32 %v558, %v562
  %s564 = scalar_lea.vmem %s0, 56
  %v565 = vld [vmem:[%s564] sm:$0xff]
  %v566 = vsel %vm33, %v563, %v565
  %v567 = vpack.c.bf16 %v566, %v566
  %568 = vmatprep.subr.bf16.mxu0 %v99
  %569 = vmatpush1.bf16.msra.mxu0 %v98
  %570 = vmatprep.subr.bf16.mxu0 %v97
  %571 = vmatpush1.bf16.msra.mxu0 %v96
  %572 = vmatprep.subr.bf16.mxu0 %v95
  %573 = vmatpush1.bf16.msra.mxu0 %v94
  %574 = vmatprep.subr.bf16.mxu0 %v93
  %575 = vmatpush1.bf16.msra.mxu0 %v92
  %576 = vmatprep.subr.bf16.mxu0 %v91
  %577 = vmatpush1.bf16.msra.mxu0 %v90
  %578 = vmatprep.subr.bf16.mxu0 %v89
  %579 = vmatpush1.bf16.msra.mxu0 %v88
  %580 = vmatprep.subr.bf16.mxu0 %v87
  %581 = vmatpush1.bf16.msra.mxu0 %v86
  %582 = vmatprep.subr.bf16.mxu0 %v85
  %583 = vmatpush1.bf16.msra.mxu0 %v84
  %584 = vmatprep.subr.bf16.mxu0 0
  %585 = vmatpush2.bf16.msra.mxu0 0
  %586 = vmatprep.subr.bf16.mxu0 0
  %587 = vmatpush2.bf16.msra.mxu0 0
  %588 = vmatprep.subr.bf16.mxu0 0
  %589 = vmatpush2.bf16.msra.mxu0 0
  %590 = vmatprep.subr.bf16.mxu0 0
  %591 = vmatpush2.bf16.msra.mxu0 0
  %592 = vmatprep.subr.bf16.mxu0 0
  %593 = vmatpush2.bf16.msra.mxu0 0
  %594 = vmatprep.subr.bf16.mxu0 0
  %595 = vmatpush2.bf16.msra.mxu0 0
  %596 = vmatprep.subr.bf16.mxu0 0
  %597 = vmatpush2.bf16.msra.mxu0 0
  %598 = vmatprep.subr.bf16.mxu0 0
  %599 = vmatpush2.bf16.msra.mxu0 0
  %600 = vmatprep.mubr.bf16.mxu0 0
  %601 = vmatmul.mubr.bf16.gmra.mxu0 %v567
  %v602 = vpop.f32.mrf.mxu0
  %v603 = vadd.f32 0.0, %v602
  %v604 = vpop.f32.mrf.mxu0
  %v605 = vadd.f32 0.0, %v604
  %v606 = vpop.f32.mrf.mxu0
  %v607 = vpop.f32.mrf.mxu0
  %608 = vdwg.mxu0
  %v609 = vmax.f32 %v605, 0.0
  %v610 = vadd.f32 %v545, %v609
  %v611 = vxor.u32 %v603, 2147483648
  %v612 = vmul.f32 %v611, 1.442695
  %v613 = vpow.pop %v612
  %v614 = vadd.f32 %v613, 1.0
  %v615 = vrcp.pop %v614
  %v616 = vmul.f32 1.0, %v615
  %v617 = vtanh.pop %v603
  %618 = vrot.lane.b32.xlu0 %v616, 96
  %v619 = vpop.permute.xlu0 %618
  %620 = vrot.lane.b32.xlu0 %v617, 64
  %v621 = vpop.permute.xlu0 %620
  %622 = vrot.lane.b32.xlu0 %v616, 32
  %v623 = vpop.permute.xlu0 %622
  %v624 = vmul.f32 %v619, %v561
  %v625 = vmul.f32 %v616, %v621
  %v626 = vadd.f32 %v624, %v625
  %v627 = vtanh.pop %v626
  %v628 = vmul.f32 %v623, %v627
  %v629 = vsel %vm33, %v628, %v34
  %v630 = vpack.c.bf16 %v629, %v629
  %631 = vmatprep.subr.bf16.mxu0 %v99
  %632 = vmatpush1.bf16.msra.mxu0 %v98
  %633 = vmatprep.subr.bf16.mxu0 %v97
  %634 = vmatpush1.bf16.msra.mxu0 %v96
  %635 = vmatprep.subr.bf16.mxu0 %v95
  %636 = vmatpush1.bf16.msra.mxu0 %v94
  %637 = vmatprep.subr.bf16.mxu0 %v93
  %638 = vmatpush1.bf16.msra.mxu0 %v92
  %639 = vmatprep.subr.bf16.mxu0 %v91
  %640 = vmatpush1.bf16.msra.mxu0 %v90
  %641 = vmatprep.subr.bf16.mxu0 %v89
  %642 = vmatpush1.bf16.msra.mxu0 %v88
  %643 = vmatprep.subr.bf16.mxu0 %v87
  %644 = vmatpush1.bf16.msra.mxu0 %v86
  %645 = vmatprep.subr.bf16.mxu0 %v85
  %646 = vmatpush1.bf16.msra.mxu0 %v84
  %647 = vmatprep.subr.bf16.mxu0 0
  %648 = vmatpush2.bf16.msra.mxu0 0
  %649 = vmatprep.subr.bf16.mxu0 0
  %650 = vmatpush2.bf16.msra.mxu0 0
  %651 = vmatprep.subr.bf16.mxu0 0
  %652 = vmatpush2.bf16.msra.mxu0 0
  %653 = vmatprep.subr.bf16.mxu0 0
  %654 = vmatpush2.bf16.msra.mxu0 0
  %655 = vmatprep.subr.bf16.mxu0 0
  %656 = vmatpush2.bf16.msra.mxu0 0
  %657 = vmatprep.subr.bf16.mxu0 0
  %658 = vmatpush2.bf16.msra.mxu0 0
  %659 = vmatprep.subr.bf16.mxu0 0
  %660 = vmatpush2.bf16.msra.mxu0 0
  %661 = vmatprep.subr.bf16.mxu0 0
  %662 = vmatpush2.bf16.msra.mxu0 0
  %663 = vmatprep.mubr.bf16.mxu0 0
  %664 = vmatmul.mubr.bf16.gmra.mxu0 %v630
  %v665 = vpop.f32.mrf.mxu0
  %v666 = vpop.f32.mrf.mxu0
  %v667 = vadd.f32 0.0, %v666
  %v668 = vpop.f32.mrf.mxu0
  %v669 = vpop.f32.mrf.mxu0
  %670 = vdwg.mxu0
  %v671 = vmax.f32 %v667, 0.0
  %v672 = vadd.f32 %v610, %v671
  %v673 = vmul.f32 %v672, 0.125
  %vm674 = vcmp.eq.s32.totalorder %v32, 32
  %v675 = vsel %vm674, 1.0, %v673
  %v676 = vpack.c.bf16 %v675, %v675
  %v677 = vld [vmem:[%s2] sm:$0xff]
  %v678 = vld [vmem:[%s2 + $0x8] sm:$0xff]
  %v679 = vld [vmem:[%s2 + $0x10] sm:$0xff]
  %v680 = vld [vmem:[%s2 + $0x18] sm:$0xff]
  %v681 = vld [vmem:[%s2 + $0x20] sm:$0xff]
  %v682 = vld [vmem:[%s2 + $0x28] sm:$0xff]
  %v683 = vld [vmem:[%s2 + $0x30] sm:$0xff]
  %v684 = vld [vmem:[%s2 + $0x38] sm:$0xff]
  %v685 = vld [vmem:[%s2 + $0x40] sm:$0xff]
  %v686 = vld [vmem:[%s2 + $0x48] sm:$0xff]
  %v687 = vld [vmem:[%s2 + $0x50] sm:$0xff]
  %v688 = vld [vmem:[%s2 + $0x58] sm:$0xff]
  %v689 = vld [vmem:[%s2 + $0x60] sm:$0xff]
  %v690 = vld [vmem:[%s2 + $0x68] sm:$0xff]
  %v691 = vld [vmem:[%s2 + $0x70] sm:$0xff]
  %v692 = vld [vmem:[%s2 + $0x78] sm:$0xff]
  %v693 = vpack.c.bf16 %v678, %v677
  %v694 = vpack.c.bf16 %v680, %v679
  %v695 = vpack.c.bf16 %v682, %v681
  %v696 = vpack.c.bf16 %v684, %v683
  %v697 = vpack.c.bf16 %v686, %v685
  %v698 = vpack.c.bf16 %v688, %v687
  %v699 = vpack.c.bf16 %v690, %v689
  %v700 = vpack.c.bf16 %v692, %v691
  %701 = vmatprep.subr.bf16.mxu0 0
  %702 = vmatpush1.bf16.msra.mxu0 %v700
  %703 = vmatprep.subr.bf16.mxu0 0
  %704 = vmatpush1.bf16.msra.mxu0 %v699
  %705 = vmatprep.subr.bf16.mxu0 0
  %706 = vmatpush1.bf16.msra.mxu0 %v698
  %707 = vmatprep.subr.bf16.mxu0 0
  %708 = vmatpush1.bf16.msra.mxu0 %v697
  %709 = vmatprep.subr.bf16.mxu0 0
  %710 = vmatpush1.bf16.msra.mxu0 %v696
  %711 = vmatprep.subr.bf16.mxu0 0
  %712 = vmatpush1.bf16.msra.mxu0 %v695
  %713 = vmatprep.subr.bf16.mxu0 0
  %714 = vmatpush1.bf16.msra.mxu0 %v694
  %715 = vmatprep.subr.bf16.mxu0 0
  %716 = vmatpush1.bf16.msra.mxu0 %v693
  %717 = vmatprep.subr.bf16.mxu0 0
  %718 = vmatpush2.bf16.msra.mxu0 0
  %719 = vmatprep.subr.bf16.mxu0 0
  %720 = vmatpush2.bf16.msra.mxu0 0
  %721 = vmatprep.subr.bf16.mxu0 0
  %722 = vmatpush2.bf16.msra.mxu0 0
  %723 = vmatprep.subr.bf16.mxu0 0
  %724 = vmatpush2.bf16.msra.mxu0 0
  %725 = vmatprep.subr.bf16.mxu0 0
  %726 = vmatpush2.bf16.msra.mxu0 0
  %727 = vmatprep.subr.bf16.mxu0 0
  %728 = vmatpush2.bf16.msra.mxu0 0
  %729 = vmatprep.subr.bf16.mxu0 0
  %730 = vmatpush2.bf16.msra.mxu0 0
  %731 = vmatprep.subr.bf16.mxu0 0
  %732 = vmatpush2.bf16.msra.mxu0 0
  %733 = vmatprep.mubr.bf16.mxu0 0
  %734 = vmatmul.mubr.bf16.gmra.mxu0 %v676
  %v735 = vpop.f32.mrf.mxu0
  %v736 = vadd.f32 0.0, %v735
  %v737 = vpop.f32.mrf.mxu0
  %v738 = vpop.f32.mrf.mxu0
  %v739 = vpop.f32.mrf.mxu0
  %740 = vdwg.mxu0
  %vm741 = vcmask 64512
  %742 = vst.msk [vmem:[%s3] sm:$0xff] %vm741, %v736
  // Predicated region
  $region14: #{lstm_classifier_forward.1} parent=0 // pred_check
    _
  $region15: #{lstm_classifier_forward.1} parent=0 // pred_check_branch
    %744 = sbr.rel (0) target = $region17
  $region16: #{lstm_classifier_forward.1} parent=0 // pred_region
    _
  $region17: #{lstm_classifier_forward.1} parent=0 // pred_fallthru
    _
  // Predicated region
  $region18: #{lstm_classifier_forward.1} parent=0 // pred_check
    _
  $region19: #{lstm_classifier_forward.1} parent=0 // pred_check_branch
    %746 = sbr.rel (0) target = $region21
  $region20: #{lstm_classifier_forward.1} parent=0 // pred_region
    _
  $region21: #{lstm_classifier_forward.1} parent=0 // pred_fallthru
    _

</llo_original>
